<compile_context>
chip_gen: v5e
topology: v5e:2x2
jax: 0.10.0
libtpu: 0.0.40
codegen_flags: <defaults>
</compile_context>

<pallas_src>
import jax
import jax.numpy as jnp
from jax.experimental import pallas as pl
from jax.experimental.pallas import tpu as pltpu


# ----------------------------------------------------------------------------
# Kernel
# ----------------------------------------------------------------------------
def _ffn_kernel(x_ref, w13_ref, w2_ref, o_ref, acc_ref):
    # grid = (M_pad // tm, hidden // th); axis 1 is the hidden-dim reduction.
    h = pl.program_id(1)

    @pl.when(h == 0)
    def _():
        acc_ref[...] = jnp.zeros_like(acc_ref)

    x = x_ref[...]                                     # (tm, dim), model dtype
    # One wide MXU matmul for both up-projections: w13 tile = [W1_h | W3_h].
    gu = jnp.dot(x, w13_ref[...],
                 preferred_element_type=jnp.float32)   # (tm, 2*th) f32
    th = w2_ref.shape[0]                               # static block size
    g = gu[:, :th]
    u = gu[:, th:]
    # SiLU(g) * u in f32 (dot outputs are already f32; keeps v5e VPU/EUP happy
    # and matches the reference numerics).
    gated = (g * jax.nn.sigmoid(g)) * u                # (tm, th) f32
    # Down-projection; cast gate to the weight dtype (bf16 serving path).
    acc_ref[...] += jnp.dot(gated.astype(w2_ref.dtype), w2_ref[...],
                            preferred_element_type=jnp.float32)   # (tm, dim)

    @pl.when(h == pl.num_programs(1) - 1)
    def _():
        o_ref[...] = acc_ref[...].astype(o_ref.dtype)


# ----------------------------------------------------------------------------
# Tiling helpers
# ----------------------------------------------------------------------------
def _round_up(x, m):
    return (x + m - 1) // m * m


def _round_down(x, m):
    return (x // m) * m


def _largest_tile(total, target, align):
    """Largest multiple-of-`align` t <= target with total % t == 0.

    If no aligned divisor exists, fall back to the full extent (single block),
    which is always layout-legal for a BlockSpec.
    """
    if total <= target:
        return total
    t = _round_down(target, align)
    while t >= align:
        if total % t == 0:
            return t
        t -= align
    return total


def _chip_config():
    """Per-generation tile targets and VMEM budget.

    tm is the only arithmetic-intensity knob (weight HBM traffic ~ 1/tm), so
    the tm target sits at each chip's bf16 compute/BW crossover; th only sets
    step granularity and is kept MXU-friendly.
    """
    kind = ""
    try:
        kind = jax.devices()[0].device_kind.lower()
    except Exception:
        pass
    if "v5" in kind:
        # v5e: ~197 TF/s, ~0.82 TB/s, 128 MiB VMEM -> crossover ~240 FLOP/B.
        return dict(tm=512, th=512, vmem=110 << 20, two_m_blocks=False)
    if "v6" in kind or "trillium" in kind:
        # v6e: ~918 TF/s, ~1.4 TB/s, 128 MiB VMEM -> crossover ~680 FLOP/B.
        return dict(tm=1024, th=512, vmem=110 << 20, two_m_blocks=False)
    # v7x (or unknown): 64 MiB VMEM per TC, ~3.2 TB/s, 2 TCs per chip.
    return dict(tm=512, th=256, vmem=56 << 20, two_m_blocks=True)


def _vmem_bytes(tm, th, dim, in_b, out_b):
    """Double-buffered I/O + resident f32 accumulator + f32 intermediates."""
    dbl = 2 * (tm * dim * in_b            # x tile
               + dim * 2 * th * in_b      # fused [W1|W3] tile
               + th * dim * in_b          # W2 tile
               + tm * dim * out_b)        # out tile
    acc = tm * dim * 4                    # f32 accumulator (resident)
    inter = (tm * 2 * th * 4              # gu (f32)
             + tm * th * 4                # gated (f32)
             + tm * th * in_b)            # gated cast to weight dtype
    return dbl + acc + inter


# ----------------------------------------------------------------------------
# One-time weight preparation (hoisted out of the forward path)
# ----------------------------------------------------------------------------
def prepare_ffn_weights(w1, w3, w2, *, dtype=None, th=None):
    """Build the kernel weight layout ONCE at weight-load time.

    Returns (w13, w2, th):
      w13: (n_h, dim, 2*th) -- hidden-block h holds [W1_h | W3_h]; each grid
           step reads one fully contiguous slab (long DMA runs).
      w2 : (hidden, dim)    -- row blocks are already contiguous.
    """
    dim, hidden = w1.shape
    assert w3.shape == (dim, hidden)
    assert w2.shape == (hidden, dim)
    if dtype is None:
        dtype = w1.dtype
    w1 = w1.astype(dtype)
    w3 = w3.astype(dtype)
    w2 = w2.astype(dtype)

    cfg = _chip_config()
    in_b = jnp.dtype(dtype).itemsize
    if th is None:
        th = _largest_tile(hidden, cfg["th"], 128)
        # Shrink th (floor 128) until the target-tm working set fits VMEM.
        while (th > 128
               and _vmem_bytes(cfg["tm"], th, dim, in_b, in_b) > cfg["vmem"]):
            new_th = _largest_tile(hidden, max(128, th // 2), 128)
            if new_th >= th:
                break
            th = new_th
    assert hidden % th == 0, "th must divide hidden"
    n_h = hidden // th

    w13 = jnp.concatenate(
        [w1.reshape(dim, n_h, th), w3.reshape(dim, n_h, th)], axis=2)
    w13 = jnp.transpose(w13, (1, 0, 2))    # (n_h, dim, 2*th), contiguous blocks
    return w13, w2, th


# ----------------------------------------------------------------------------
# Forward with prepared weights
# ----------------------------------------------------------------------------
def feed_forward_prepared(x, w13, w2, *, tm=None):
    """x: [..., dim]; w13: (n_h, dim, 2*th); w2: (hidden, dim)."""
    orig_shape = x.shape
    dim = orig_shape[-1]
    n_h, dim_w, two_th = w13.shape
    assert dim_w == dim
    th = two_th // 2
    hidden = n_h * th
    assert w2.shape == (hidden, dim)

    cdtype = x.dtype
    if w13.dtype != cdtype:
        w13 = w13.astype(cdtype)
    if w2.dtype != cdtype:
        w2 = w2.astype(cdtype)

    x2d = x.reshape(-1, dim)
    M = x2d.shape[0]
    in_b = jnp.dtype(cdtype).itemsize
    out_b = in_b

    cfg = _chip_config()
    vmem_cap = cfg["vmem"]

    # bf16 packs (16,128) per vreg: keep tm a multiple of 16 (8 for f32).
    tm_floor = 16 if in_b <= 2 else 8
    if tm is None:
        tm = min(cfg["tm"], _round_up(M, tm_floor))
    tm = max(tm_floor, _round_up(tm, tm_floor))
    if tm >= 128:
        tm = max(128, _round_down(tm, 128))        # MXU-native multiples

    # Shrink tm until the working set (incl. f32 intermediates) fits VMEM.
    while _vmem_bytes(tm, th, dim, in_b, out_b) > vmem_cap and tm > tm_floor:
        tm = max(tm_floor, _round_down(tm // 2, tm_floor))

    # v7x: 2 TensorCores per chip -- make sure the "parallel" M axis has at
    # least two blocks so both cores get work.
    if cfg["two_m_blocks"]:
        while _round_up(M, tm) // tm < 2 and tm > tm_floor:
            tm = max(tm_floor, _round_down(tm // 2, tm_floor))

    # Pad token axis to a tile multiple (ragged batches / decode).
    M_pad = _round_up(M, tm)
    if M_pad != M:
        x2d = jnp.pad(x2d, ((0, M_pad - M), (0, 0)))

    cost = pl.CostEstimate(
        flops=6 * M_pad * dim * hidden,
        transcendentals=M_pad * hidden,
        bytes_accessed=(M_pad * dim * (in_b + out_b)
                        + (M_pad // tm) * 3 * dim * hidden * in_b),
    )

    out = pl.pallas_call(
        _ffn_kernel,
        out_shape=jax.ShapeDtypeStruct((M_pad, dim), cdtype),
        grid_spec=pltpu.PrefetchScalarGridSpec(
            num_scalar_prefetch=0,
            grid=(M_pad // tm, n_h),
            in_specs=[
                pl.BlockSpec((tm, dim), lambda i, h: (i, 0)),              # x
                pl.BlockSpec((None, dim, 2 * th), lambda i, h: (h, 0, 0)),  # [W1|W3]_h
                pl.BlockSpec((th, dim), lambda i, h: (h, 0)),              # W2_h
            ],
            out_specs=pl.BlockSpec((tm, dim), lambda i, h: (i, 0)),
            scratch_shapes=[pltpu.VMEM((tm, dim), jnp.float32)],
        ),
        compiler_params=pltpu.CompilerParams(
            dimension_semantics=("parallel", "arbitrary"),
            vmem_limit_bytes=int(vmem_cap),
        ),
        cost_estimate=cost,
    )(x2d, w13, w2)

    if M_pad != M:
        out = out[:M]
    return out.reshape(orig_shape)


def make_feed_forward(w1, w3, w2, *, dtype=None, th=None, tm=None):
    """Prepare weights once; return a forward callable (the serving path)."""
    w13, w2p, _ = prepare_ffn_weights(w1, w3, w2, dtype=dtype, th=th)

    def fwd(x):
        return feed_forward_prepared(x, w13, w2p, tm=tm)

    return fwd


def feed_forward_pallas(x, w1, w3, w2, *, tm=None, th=None):
    """One-shot convenience wrapper (prep + forward). Prefer make_feed_forward
    so the weight interleave is paid once, not per call."""
    w13, w2p, _ = prepare_ffn_weights(w1, w3, w2, dtype=x.dtype, th=th)
    return feed_forward_prepared(x, w13, w2p, tm=tm)


# ----------------------------------------------------------------------------
# Reference / module plumbing
# ----------------------------------------------------------------------------
def llama_hidden_dim(dim, hidden_dim, multiple_of, ffn_dim_multiplier):
    hidden_dim = int(2 * hidden_dim / 3)
    if ffn_dim_multiplier is not None:
        hidden_dim = int(ffn_dim_multiplier * hidden_dim)
    hidden_dim = multiple_of * ((hidden_dim + multiple_of - 1) // multiple_of)
    return hidden_dim


def reference_ffn(x, w1, w3, w2):
    g = jnp.dot(x, w1, preferred_element_type=jnp.float32)
    u = jnp.dot(x, w3, preferred_element_type=jnp.float32)
    gated = (jax.nn.silu(g) * u).astype(w2.dtype)
    return jnp.dot(gated, w2, preferred_element_type=jnp.float32).astype(x.dtype)


if __name__ == "__main__":
    # Small but TPU-tile-friendly shapes (Llama formula: hidden = 384).
    dim = 128
    hidden_dim_arg = 512
    multiple_of = 128
    ffn_dim_multiplier = None
    hidden = llama_hidden_dim(dim, hidden_dim_arg, multiple_of,
                              ffn_dim_multiplier)   # = 384

    batch, seq = 2, 64   # M = 128 tokens

    key = jax.random.PRNGKey(0)
    kx, k1, k2, k3 = jax.random.split(key, 4)
    scale = 0.05
    x_f32 = jax.random.normal(kx, (batch, seq, dim), dtype=jnp.float32)
    # Stored as [in, out] (transposed vs. PyTorch nn.Linear weight [out, in]).
    w1 = scale * jax.random.normal(k1, (dim, hidden), dtype=jnp.float32)
    w3 = scale * jax.random.normal(k3, (dim, hidden), dtype=jnp.float32)
    w2 = scale * jax.random.normal(k2, (hidden, dim), dtype=jnp.float32)

    # ---- f32 path: strict correctness check (weights prepared once) ----
    ffn_f32 = make_feed_forward(w1, w3, w2, dtype=jnp.float32)
    out = jax.block_until_ready(ffn_f32(x_f32))
    ref = reference_ffn(x_f32.reshape(-1, dim), w1, w3, w2).reshape(x_f32.shape)
    assert out.shape == x_f32.shape
    assert jnp.allclose(out, ref, atol=1e-4, rtol=1e-4), "f32 mismatch"

    # ---- bf16 serving path (the perf-tuned configuration) ----
    xb = x_f32.astype(jnp.bfloat16)
    w1b, w3b, w2b = (w.astype(jnp.bfloat16) for w in (w1, w3, w2))
    ffn_bf16 = make_feed_forward(w1b, w3b, w2b, dtype=jnp.bfloat16)
    outb = jax.block_until_ready(ffn_bf16(xb))
    refb = reference_ffn(xb.reshape(-1, dim), w1b, w3b, w2b).reshape(x_f32.shape)
    assert outb.dtype == jnp.bfloat16
    err = jnp.max(jnp.abs(outb.astype(jnp.float32) - refb.astype(jnp.float32)))
    assert float(err) < 5e-2, f"bf16 mismatch: {float(err)}"

    # ---- ragged-M path (exercises padding + one-shot convenience wrapper) ----
    x_rag = x_f32[:, :37, :]
    out_rag = jax.block_until_ready(feed_forward_pallas(x_rag, w1, w3, w2))
    ref_rag = reference_ffn(x_rag.reshape(-1, dim), w1, w3, w2).reshape(x_rag.shape)
    assert jnp.allclose(out_rag, ref_rag, atol=1e-4, rtol=1e-4), "ragged mismatch"

    print("KERNEL_OK")
</pallas_src>

<mosaic_0001>
module attributes {stable_mosaic.version = 11 : i64} {
  func.func @_ffn_kernel(%arg0: i32, %arg1: i32, %arg2: memref<64x128xf32, #tpu.memory_space<vmem>>, %arg3: memref<1x128x256xf32, #tpu.memory_space<vmem>>, %arg4: memref<128x128xf32, #tpu.memory_space<vmem>>, %arg5: memref<64x128xf32, #tpu.memory_space<vmem>>, %arg6: memref<64x128xf32, #tpu.memory_space<vmem>>) attributes {dimension_semantics = [#tpu.dimension_semantics<parallel>, #tpu.dimension_semantics<arbitrary>], iteration_bounds = array<i64: 2, 3>, scalar_prefetch = 0 : i64, scratch_operands = 1 : i64, tpu.core_type = #tpu.core_type<tc>, window_params = [{transform_indices = @transform_0, window_bounds = array<i64: 64, 128>}, {transform_indices = @transform_1, window_bounds = array<i64: 1, 128, 256>}, {transform_indices = @transform_2, window_bounds = array<i64: 128, 128>}, {transform_indices = @transform_3, window_bounds = array<i64: 64, 128>}]} {
    %c0_i32 = arith.constant 0 : i32
    %0 = arith.cmpi eq, %arg1, %c0_i32 : i32
    %1 = arith.extui %0 : i1 to i32
    %c0_i32_0 = arith.constant 0 : i32
    %2 = arith.cmpi ne, %1, %c0_i32_0 : i32
    scf.if %2 {
      %cst_14 = arith.constant 0.000000e+00 : f32
      %24 = vector.broadcast %cst_14 : f32 to vector<64x128xf32>
      %c0_15 = arith.constant 0 : index
      %c0_16 = arith.constant 0 : index
      %25 = vector.load %arg6[%c0_15, %c0_16] : memref<64x128xf32, #tpu.memory_space<vmem>>, vector<64x128xf32>
      tpu.vector_store %arg6[%c0_15, %c0_16], %24 {strides = array<i32>} : memref<64x128xf32, #tpu.memory_space<vmem>>, vector<64x128xf32>,
    } else {
    }
    %c0 = arith.constant 0 : index
    %c0_1 = arith.constant 0 : index
    %3 = vector.load %arg2[%c0, %c0_1] : memref<64x128xf32, #tpu.memory_space<vmem>>, vector<64x128xf32>
    %c0_2 = arith.constant 0 : index
    %c0_3 = arith.constant 0 : index
    %c0_4 = arith.constant 0 : index
    %4 = vector.load %arg3[%c0_2, %c0_3, %c0_4] : memref<1x128x256xf32, #tpu.memory_space<vmem>>, vector<1x128x256xf32>
    %5 = vector.shape_cast %4 : vector<1x128x256xf32> to vector<128x256xf32>
    %cst = arith.constant dense<0.000000e+00> : vector<64x256xf32>
    %6 = tpu.matmul %3, %5, %cst {dimension_numbers = #tpu.dot_dimension_numbers<[1], [0], [0], [1], [0, 0, 1, 1], [], []>} : vector<64x128xf32>, vector<128x256xf32>, vector<64x256xf32> -> vector<64x256xf32>
    %7 = vector.extract_strided_slice %6 {offsets = [0, 0], sizes = [64, 128], strides = [1, 1]} : vector<64x256xf32> to vector<64x128xf32>
    %8 = vector.extract_strided_slice %6 {offsets = [0, 128], sizes = [64, 128], strides = [1, 1]} : vector<64x256xf32> to vector<64x128xf32>
    %9 = arith.negf %7 : vector<64x128xf32>
    %10 = math.exp %9 : vector<64x128xf32>
    %cst_5 = arith.constant 1.000000e+00 : f32
    %11 = vector.broadcast %cst_5 : f32 to vector<64x128xf32>
    %12 = arith.addf %11, %10 : vector<64x128xf32>
    %13 = arith.divf %11, %12 : vector<64x128xf32>
    %14 = arith.mulf %7, %13 : vector<64x128xf32>
    %15 = arith.mulf %14, %8 : vector<64x128xf32>
    %c0_6 = arith.constant 0 : index
    %c0_7 = arith.constant 0 : index
    %16 = vector.load %arg6[%c0_6, %c0_7] : memref<64x128xf32, #tpu.memory_space<vmem>>, vector<64x128xf32>
    %c0_8 = arith.constant 0 : index
    %c0_9 = arith.constant 0 : index
    %17 = vector.load %arg4[%c0_8, %c0_9] : memref<128x128xf32, #tpu.memory_space<vmem>>, vector<128x128xf32>
    %cst_10 = arith.constant dense<0.000000e+00> : vector<64x128xf32>
    %18 = tpu.matmul %15, %17, %cst_10 {dimension_numbers = #tpu.dot_dimension_numbers<[1], [0], [0], [1], [0, 0, 1, 1], [], []>} : vector<64x128xf32>, vector<128x128xf32>, vector<64x128xf32> -> vector<64x128xf32>
    %19 = arith.addf %16, %18 : vector<64x128xf32>
    %c0_11 = arith.constant 0 : index
    %c0_12 = arith.constant 0 : index
    %20 = vector.load %arg6[%c0_11, %c0_12] : memref<64x128xf32, #tpu.memory_space<vmem>>, vector<64x128xf32>
    tpu.vector_store %arg6[%c0_11, %c0_12], %19 {strides = array<i32>} : memref<64x128xf32, #tpu.memory_space<vmem>>, vector<64x128xf32>,
    %c2_i32 = arith.constant 2 : i32
    %21 = arith.cmpi eq, %arg1, %c2_i32 : i32
    %22 = arith.extui %21 : i1 to i32
    %c0_i32_13 = arith.constant 0 : i32
    %23 = arith.cmpi ne, %22, %c0_i32_13 : i32
    scf.if %23 {
      %c0_14 = arith.constant 0 : index
      %c0_15 = arith.constant 0 : index
      %24 = vector.load %arg6[%c0_14, %c0_15] : memref<64x128xf32, #tpu.memory_space<vmem>>, vector<64x128xf32>
      %c0_16 = arith.constant 0 : index
      %c0_17 = arith.constant 0 : index
      %25 = vector.load %arg5[%c0_16, %c0_17] : memref<64x128xf32, #tpu.memory_space<vmem>>, vector<64x128xf32>
      tpu.vector_store %arg5[%c0_16, %c0_17], %24 {strides = array<i32>} : memref<64x128xf32, #tpu.memory_space<vmem>>, vector<64x128xf32>,
    } else {
    }
    return
  }
  func.func @transform_0(%arg0: i32, %arg1: i32) -> (i32, i32) {
    %c0_i32 = arith.constant 0 : i32
    %c0_i32_0 = arith.constant 0 : i32
    return %arg0, %c0_i32 : i32, i32
  }
  func.func @transform_1(%arg0: i32, %arg1: i32) -> (i32, i32, i32) {
    %c0_i32 = arith.constant 0 : i32
    %c0_i32_0 = arith.constant 0 : i32
    %c0_i32_1 = arith.constant 0 : i32
    return %arg1, %c0_i32, %c0_i32_0 : i32, i32, i32
  }
  func.func @transform_2(%arg0: i32, %arg1: i32) -> (i32, i32) {
    %c0_i32 = arith.constant 0 : i32
    %c0_i32_0 = arith.constant 0 : i32
    return %arg1, %c0_i32 : i32, i32
  }
  func.func @transform_3(%arg0: i32, %arg1: i32) -> (i32, i32) {
    %c0_i32 = arith.constant 0 : i32
    %c0_i32_0 = arith.constant 0 : i32
    return %arg0, %c0_i32 : i32, i32
  }
}

</mosaic_0001>

<llo_original>
// kernel: tpu_custom_call.1
$region0: #{tpu_custom_call.1}
  #allocation0 [shape = 'u32[]', space=smem, size = 0x4, offset = 0x4, fixed_abs, tag = 'smem constant byte address 0x4 - core index']
  #allocation1 [shape = 'u32[72,128]{1,0:T(1,128)}', space=vmem, size = 0x9000, scoped, tag = 'internal scratch']
  #allocation2 [shape = 'f32[64,128]{1,0:T(8,128)}', space=vmem, size = 0x8000, scoped, tag = 'scratch operand']
  %s0 = inlined_call_operand.hbm [shape: f32[128,128], index: 0, kind: input, shape index: {}]
  %s1 = inlined_call_operand.hbm [shape: f32[3,128,256], index: 1, kind: input, shape index: {}]
  %s2 = inlined_call_operand.hbm [shape: f32[384,128], index: 2, kind: input, shape index: {}]
  %s3 = inlined_call_operand.hbm [shape: f32[128,128], index: 3, kind: output, shape index: {}]
  %s4 = sld [smem:[#allocation0]]
  $region65: #{tpu_custom_call.1} parent=0
    _
  %s6 = ssub.s32 1, %s4
  %s7 = scalar_select 0, %s6, %s4
  $region1: #{tpu_custom_call.1} parent=0
    #allocation3 [shape = 'u8[65536]{0}', space=vmem, size = 0x10000, scoped, tag = 'input window, operand 0']
    #allocation4 [shape = 's32[2]{0}', space=sflag, size = 0x8, scoped, tag = 'scoped memory for tpu_custom_call.1']
    #allocation5 [shape = 's32[2]{0}', space=sflag, size = 0x8, scoped, tag = 'scoped memory for tpu_custom_call.1']
    #allocation6 [shape = 'u8[262144]{0}', space=vmem, size = 0x40000, scoped, tag = 'input window, operand 1']
    #allocation7 [shape = 's32[2]{0}', space=sflag, size = 0x8, scoped, tag = 'scoped memory for tpu_custom_call.1']
    #allocation8 [shape = 'u8[131072]{0}', space=vmem, size = 0x20000, scoped, tag = 'input window, operand 2']
    #allocation9 [shape = 'u8[65536]{0}', space=vmem, size = 0x10000, scoped, tag = 'output window, operand 0']
    %8 = vsyncpa [#allocation4], 0
    %s9 = scalar_lea.sflag [#allocation4], 1
    %10 = vsyncpa %s9, 0
    %11 = vsyncpa [#allocation7], 0
    %s12 = scalar_lea.sflag [#allocation7], 1
    %13 = vsyncpa %s12, 0
    %14 = vsyncpa [#allocation5], 0
    %s15 = scalar_lea.sflag [#allocation5], 1
    %16 = vsyncpa %s15, 0
    loop: start=0, step=1, limit=8
    $region2: #{tpu_custom_call.1} parent=1 // loop_pre_header
      _
    $region3: #{tpu_custom_call.1} parent=1 // loop_header
      %s18 = sphi 0, %s22
      %p19 = scmp.ge.s32.totalorder %s18, 8
      %s25 = sphi 0, %s37
      %s26 = sphi 0, %s33
      %s27 = sphi 0, %s25
      %s28 = sphi 0, %s26
      %s29 = sphi 0, %s27
      %s30 = sphi 0, %s28
      %s40 = sphi 0, %s42
      %s43 = sphi 0, %s40
      %s44 = sphi 0, %s43
      %s60 = sphi 0, %s44
      %s66 = sphi 0, %s68
      %s69 = sphi 0, %s66
      %s70 = sphi 0, %s69
      %s86 = sphi 0, %s70
      %s92 = sphi 0, %s94
      %s95 = sphi 0, %s92
      %s96 = sphi 0, %s95
      %s112 = sphi 0, %s96
      %s118 = sphi 0, %s120
      %s121 = sphi 0, %s118
      %s122 = sphi 0, %s121
      %s138 = sphi 0, %s122
    $region4: #{tpu_custom_call.1} parent=1 // loop_header_branch
      %21 = sbr.rel (%p19) target = $region8
    $region5: #{tpu_custom_call.1} parent=1 // loop_body
      %s23 = ssub.s32 %s18, 1
      %s24 = ssub.s32 %s18, 2
      %s31 = sadd.s32 1, %s26
      %p32 = scmp.ge.s32.totalorder %s31, 3
      %s33 = scalar_select %p32, 0, %s31
      %s34 = sadd.s32 1, %s25
      %s35 = scalar_select %p32, %s34, %s25
      %p36 = scmp.ge.s32.totalorder %s35, 2
      %s37 = scalar_select %p36, 0, %s35
      %s38 = ssub.s32 %s25, %s37
      %p39 = scmp.eq.s32.totalorder %s38, 0
      %s41 = sadd.s32 %s40, 1
      %s42 = scalar_select %p39, %s40, %s41
      %p45 = pneg %p39
      %p46 = scmp.eq.s32.totalorder %s18, 5
      %p47 = por %p45, %p46
      %p48 = scmp.ne.s32.totalorder %s40, %s43
      %p49 = scmp.eq.s32.totalorder %s18, 0
      %p50 = por %p48, %p49
      %p51 = scmp.ne.s32.totalorder %s40, %s43
      %p52 = scmp.eq.s32.totalorder %s23, 5
      %p53 = por %p51, %p52
      %p54 = scmp.ne.s32.totalorder %s43, %s44
      %p55 = scmp.eq.s32.totalorder %s23, 0
      %p56 = por %p54, %p55
      %p57 = scmp.ne.s32.totalorder %s43, %s44
      %p58 = scmp.eq.s32.totalorder %s24, 5
      %p59 = por %p57, %p58
      %p61 = scmp.ne.s32.totalorder %s44, %s60
      %p62 = scmp.eq.s32.totalorder %s24, 0
      %p63 = por %p61, %p62
      %s64 = ssub.s32 %s26, %s33
      %p65 = scmp.eq.s32.totalorder %s64, 0
      %s67 = sadd.s32 %s66, 1
      %s68 = scalar_select %p65, %s66, %s67
      %p71 = pneg %p65
      %p72 = scmp.eq.s32.totalorder %s18, 5
      %p73 = por %p71, %p72
      %p74 = scmp.ne.s32.totalorder %s66, %s69
      %p75 = scmp.eq.s32.totalorder %s18, 0
      %p76 = por %p74, %p75
      %p77 = scmp.ne.s32.totalorder %s66, %s69
      %p78 = scmp.eq.s32.totalorder %s23, 5
      %p79 = por %p77, %p78
      %p80 = scmp.ne.s32.totalorder %s69, %s70
      %p81 = scmp.eq.s32.totalorder %s23, 0
      %p82 = por %p80, %p81
      %p83 = scmp.ne.s32.totalorder %s69, %s70
      %p84 = scmp.eq.s32.totalorder %s24, 5
      %p85 = por %p83, %p84
      %p87 = scmp.ne.s32.totalorder %s70, %s86
      %p88 = scmp.eq.s32.totalorder %s24, 0
      %p89 = por %p87, %p88
      %s90 = ssub.s32 %s26, %s33
      %p91 = scmp.eq.s32.totalorder %s90, 0
      %s93 = sadd.s32 %s92, 1
      %s94 = scalar_select %p91, %s92, %s93
      %p97 = pneg %p91
      %p98 = scmp.eq.s32.totalorder %s18, 5
      %p99 = por %p97, %p98
      %p100 = scmp.ne.s32.totalorder %s92, %s95
      %p101 = scmp.eq.s32.totalorder %s18, 0
      %p102 = por %p100, %p101
      %p103 = scmp.ne.s32.totalorder %s92, %s95
      %p104 = scmp.eq.s32.totalorder %s23, 5
      %p105 = por %p103, %p104
      %p106 = scmp.ne.s32.totalorder %s95, %s96
      %p107 = scmp.eq.s32.totalorder %s23, 0
      %p108 = por %p106, %p107
      %p109 = scmp.ne.s32.totalorder %s95, %s96
      %p110 = scmp.eq.s32.totalorder %s24, 5
      %p111 = por %p109, %p110
      %p113 = scmp.ne.s32.totalorder %s96, %s112
      %p114 = scmp.eq.s32.totalorder %s24, 0
      %p115 = por %p113, %p114
      %s116 = ssub.s32 %s25, %s37
      %p117 = scmp.eq.s32.totalorder %s116, 0
      %s119 = sadd.s32 %s118, 1
      %s120 = scalar_select %p117, %s118, %s119
      %p123 = pneg %p117
      %p124 = scmp.eq.s32.totalorder %s18, 5
      %p125 = por %p123, %p124
      %p126 = scmp.ne.s32.totalorder %s118, %s121
      %p127 = scmp.eq.s32.totalorder %s18, 0
      %p128 = por %p126, %p127
      %p129 = scmp.ne.s32.totalorder %s118, %s121
      %p130 = scmp.eq.s32.totalorder %s23, 5
      %p131 = por %p129, %p130
      %p132 = scmp.ne.s32.totalorder %s121, %s122
      %p133 = scmp.eq.s32.totalorder %s23, 0
      %p134 = por %p132, %p133
      %p135 = scmp.ne.s32.totalorder %s121, %s122
      %p136 = scmp.eq.s32.totalorder %s24, 5
      %p137 = por %p135, %p136
      %p139 = scmp.ne.s32.totalorder %s122, %s138
      %p140 = scmp.eq.s32.totalorder %s24, 0
      %p141 = por %p139, %p140
      %p142 = scmp.le.s32.totalorder 1, %s18
      %p143 = scmp.lt.s32.totalorder %s18, 7
      %p144 = pnand %p142, %p143
      %p145 = pneg %p144
      // Predicated region
      $region9: #{tpu_custom_call.1} parent=5 // pred_check
        _
      $region10: #{tpu_custom_call.1} parent=5 // pred_check_branch
        %147 = sbr.rel (%p144) target = $region12
      $region11: #{tpu_custom_call.1} parent=5 // pred_region
        %s148 = ssub.s32 %s18, 1
      $region12: #{tpu_custom_call.1} parent=5 // pred_fallthru
        _
      %p149 = scmp.lt.s32.totalorder %s18, 6
      // Predicated region
      $region13: #{tpu_custom_call.1} parent=5 // pred_check
        %p150 = pneg %p149
      $region14: #{tpu_custom_call.1} parent=5 // pred_check_branch
        %152 = sbr.rel (%p150) target = $region16
      $region15: #{tpu_custom_call.1} parent=5 // pred_region
        // Predicated region
        $region17: #{tpu_custom_call.1} parent=15 // pred_check
          %p153 = pneg %p50
        $region18: #{tpu_custom_call.1} parent=15 // pred_check_branch
          %155 = sbr.rel (%p153) target = $region20
        $region19: #{tpu_custom_call.1} parent=15 // pred_region
          %s156 = sand.u32 %s40, 1
          %s157 = scalar_lea.sflag [#allocation4], %s156
          %s158 = sand.u32 %s40, 1
          %s159 = smul.addr %s158, 64
          %s160 = scalar_lea.vmem [#allocation3], %s159
          %s161 = smul.u32 8, %s25
          %163 = vsyncadd %s157, 0
          %s164 = smul.addr %s161, 8
          %s165 = scalar_lea.hbm %s0, %s164
          %s166 = sshll.u32 %s165, 4
          %s167 = int_to_ptr.hbm [resolvable:$true] %s166
          %s168 = sshll.u32 %s160, 4
          %s169 = int_to_ptr.vmem [resolvable:$true] %s168
          %174 = dma.hbm_to_vmem [thread:$0]  %s167, 1024, %s169, %s157, 128, 128, 8
        $region20: #{tpu_custom_call.1} parent=15 // pred_fallthru
          _
        // Predicated region
        $region21: #{tpu_custom_call.1} parent=15 // pred_check
          %p175 = pneg %p76
        $region22: #{tpu_custom_call.1} parent=15 // pred_check_branch
          %177 = sbr.rel (%p175) target = $region24
        $region23: #{tpu_custom_call.1} parent=15 // pred_region
          %s178 = sand.u32 %s18, 1
          %s179 = scalar_lea.sflag [#allocation7], %s178
          %s180 = sand.u32 %s66, 1
          %s181 = smul.addr %s180, 256
          %s182 = scalar_lea.vmem [#allocation6], %s181
          %184 = vsyncadd %s179, 0
          %s185 = smul.addr %s26, 32
          %s186 = smul.addr %s185, 8
          %s187 = scalar_lea.hbm %s1, %s186
          %s188 = sshll.u32 %s187, 4
          %s189 = int_to_ptr.hbm [resolvable:$true] %s188
          %s190 = sshll.u32 %s182, 4
          %s191 = int_to_ptr.vmem [resolvable:$true] %s190
          %196 = dma.hbm_to_vmem [thread:$0]  %s189, 4096, %s191, %s179, 256, 256, 16
        $region24: #{tpu_custom_call.1} parent=15 // pred_fallthru
          _
        // Predicated region
        $region25: #{tpu_custom_call.1} parent=15 // pred_check
          %p197 = pneg %p102
        $region26: #{tpu_custom_call.1} parent=15 // pred_check_branch
          %199 = sbr.rel (%p197) target = $region28
        $region27: #{tpu_custom_call.1} parent=15 // pred_region
          %s200 = sand.u32 %s18, 1
          %s201 = scalar_lea.sflag [#allocation7], %s200
          %s202 = sand.u32 %s92, 1
          %s203 = smul.addr %s202, 128
          %s204 = scalar_lea.vmem [#allocation8], %s203
          %s205 = smul.u32 16, %s26
          %207 = vsyncadd %s201, 0
          %s208 = smul.addr %s205, 8
          %s209 = scalar_lea.hbm %s2, %s208
          %s210 = sshll.u32 %s209, 4
          %s211 = int_to_ptr.hbm [resolvable:$true] %s210
          %s212 = sshll.u32 %s204, 4
          %s213 = int_to_ptr.vmem [resolvable:$true] %s212
          %218 = dma.hbm_to_vmem [thread:$0]  %s211, 2048, %s213, %s201, 128, 128, 8
        $region28: #{tpu_custom_call.1} parent=15 // pred_fallthru
          _
      $region16: #{tpu_custom_call.1} parent=5 // pred_fallthru
        _
      %p219 = scmp.le.s32.totalorder 1, %s18
      %p220 = scmp.lt.s32.totalorder %s18, 7
      %p221 = pnand %p219, %p220
      %p222 = pneg %p221
      // Predicated region
      $region29: #{tpu_custom_call.1} parent=5 // pred_check
        _
      $region30: #{tpu_custom_call.1} parent=5 // pred_check_branch
        %224 = sbr.rel (%p221) target = $region32
      $region31: #{tpu_custom_call.1} parent=5 // pred_region
        %s225 = ssub.s32 %s18, 1
        %s226 = sand.u32 %s43, 1
        %s227 = scalar_lea.sflag [#allocation4], %s226
        %s228 = sand.u32 %s43, 1
        %s229 = smul.addr %s228, 64
        %s230 = scalar_lea.vmem [#allocation3], %s229
        // Predicated region
        $region33: #{tpu_custom_call.1} parent=31 // pred_check
          %p231 = pneg %p56
        $region34: #{tpu_custom_call.1} parent=31 // pred_check_branch
          %233 = sbr.rel (%p231) target = $region36
        $region35: #{tpu_custom_call.1} parent=31 // pred_region
          %235 = dma.done %s227, 1024
        $region36: #{tpu_custom_call.1} parent=31 // pred_fallthru
          _
        %s236 = sand.u32 %s23, 1
        %s237 = scalar_lea.sflag [#allocation7], %s236
        %s238 = sand.u32 %s69, 1
        %s239 = smul.addr %s238, 256
        %s240 = scalar_lea.vmem [#allocation6], %s239
        // Predicated region
        $region37: #{tpu_custom_call.1} parent=31 // pred_check
          %p241 = pneg %p82
        $region38: #{tpu_custom_call.1} parent=31 // pred_check_branch
          %243 = sbr.rel (%p241) target = $region40
        $region39: #{tpu_custom_call.1} parent=31 // pred_region
          %245 = dma.done %s237, 4096
        $region40: #{tpu_custom_call.1} parent=31 // pred_fallthru
          _
        %s246 = sand.u32 %s23, 1
        %s247 = scalar_lea.sflag [#allocation7], %s246
        %s248 = sand.u32 %s95, 1
        %s249 = smul.addr %s248, 128
        %s250 = scalar_lea.vmem [#allocation8], %s249
        // Predicated region
        $region41: #{tpu_custom_call.1} parent=31 // pred_check
          %p251 = pneg %p108
        $region42: #{tpu_custom_call.1} parent=31 // pred_check_branch
          %253 = sbr.rel (%p251) target = $region44
        $region43: #{tpu_custom_call.1} parent=31 // pred_region
          %255 = dma.done %s247, 2048
        $region44: #{tpu_custom_call.1} parent=31 // pred_fallthru
          _
        %s256 = sand.u32 %s43, 1
        %s257 = scalar_lea.sflag [#allocation4], %s256
        %s258 = sand.u32 %s43, 1
        %s259 = smul.addr %s258, 64
        %s260 = scalar_lea.vmem [#allocation3], %s259
        %p261 = pneg %p56
        %p262 = pneg %p53
        %s263 = sand.u32 %s23, 1
        %s264 = scalar_lea.sflag [#allocation7], %s263
        %s265 = sand.u32 %s69, 1
        %s266 = smul.addr %s265, 256
        %s267 = scalar_lea.vmem [#allocation6], %s266
        %p268 = pneg %p82
        %p269 = pneg %p79
        %s270 = sand.u32 %s23, 1
        %s271 = scalar_lea.sflag [#allocation7], %s270
        %s272 = sand.u32 %s95, 1
        %s273 = smul.addr %s272, 128
        %s274 = scalar_lea.vmem [#allocation8], %s273
        %p275 = pneg %p108
        %p276 = pneg %p105
        %p277 = pneg %p134
        %p278 = pneg %p131
        %s279 = sand.u32 %s121, 1
        %s280 = scalar_lea.sflag [#allocation5], %s279
        %s281 = sand.u32 %s121, 1
        %s282 = smul.addr %s281, 64
        %s283 = scalar_lea.vmem [#allocation9], %s282
        %s284 = smul.u32 8, %s27
        %s285 = smul.u32 16, %s28
        %s286 = smul.u32 8, %s27
        %p287 = scmp.eq.s32.totalorder %s28, 0
        // Predicated region
        $region45: #{tpu_custom_call.1} parent=31 // pred_check
          %p288 = pneg %p287
        $region46: #{tpu_custom_call.1} parent=31 // pred_check_branch
          %290 = sbr.rel (%p288) target = $region48
        $region47: #{tpu_custom_call.1} parent=31 // pred_region
          %291 = vst [vmem:[#allocation2] sm:$0xff] 0.0
          %292 = vst [vmem:[#allocation2 + $0x8] sm:$0xff] 0.0
          %293 = vst [vmem:[#allocation2 + $0x10] sm:$0xff] 0.0
          %294 = vst [vmem:[#allocation2 + $0x18] sm:$0xff] 0.0
          %295 = vst [vmem:[#allocation2 + $0x20] sm:$0xff] 0.0
          %296 = vst [vmem:[#allocation2 + $0x28] sm:$0xff] 0.0
          %297 = vst [vmem:[#allocation2 + $0x30] sm:$0xff] 0.0
          %298 = vst [vmem:[#allocation2 + $0x38] sm:$0xff] 0.0
        $region48: #{tpu_custom_call.1} parent=31 // pred_fallthru
          _
        %v299 = vld [vmem:[%s230] sm:$0xff]
        %v300 = vld [vmem:[%s230 + $0x8] sm:$0xff]
        %v301 = vld [vmem:[%s230 + $0x10] sm:$0xff]
        %v302 = vld [vmem:[%s230 + $0x18] sm:$0xff]
        %v303 = vld [vmem:[%s230 + $0x20] sm:$0xff]
        %v304 = vld [vmem:[%s230 + $0x28] sm:$0xff]
        %v305 = vld [vmem:[%s230 + $0x30] sm:$0xff]
        %v306 = vld [vmem:[%s230 + $0x38] sm:$0xff]
        %v307 = vld [vmem:[%s240] sm:$0xff]
        %v308 = vld [vmem:[%s240 + $0x8] sm:$0xff]
        %v309 = vld [vmem:[%s240 + $0x10] sm:$0xff]
        %v310 = vld [vmem:[%s240 + $0x18] sm:$0xff]
        %v311 = vld [vmem:[%s240 + $0x20] sm:$0xff]
        %v312 = vld [vmem:[%s240 + $0x28] sm:$0xff]
        %v313 = vld [vmem:[%s240 + $0x30] sm:$0xff]
        %v314 = vld [vmem:[%s240 + $0x38] sm:$0xff]
        %v315 = vld [vmem:[%s240 + $0x40] sm:$0xff]
        %v316 = vld [vmem:[%s240 + $0x48] sm:$0xff]
        %v317 = vld [vmem:[%s240 + $0x50] sm:$0xff]
        %v318 = vld [vmem:[%s240 + $0x58] sm:$0xff]
        %v319 = vld [vmem:[%s240 + $0x60] sm:$0xff]
        %v320 = vld [vmem:[%s240 + $0x68] sm:$0xff]
        %v321 = vld [vmem:[%s240 + $0x70] sm:$0xff]
        %v322 = vld [vmem:[%s240 + $0x78] sm:$0xff]
        %v323 = vld [vmem:[%s240 + $0x80] sm:$0xff]
        %v324 = vld [vmem:[%s240 + $0x88] sm:$0xff]
        %v325 = vld [vmem:[%s240 + $0x90] sm:$0xff]
        %v326 = vld [vmem:[%s240 + $0x98] sm:$0xff]
        %v327 = vld [vmem:[%s240 + $0xa0] sm:$0xff]
        %v328 = vld [vmem:[%s240 + $0xa8] sm:$0xff]
        %v329 = vld [vmem:[%s240 + $0xb0] sm:$0xff]
        %v330 = vld [vmem:[%s240 + $0xb8] sm:$0xff]
        %v331 = vld [vmem:[%s240 + $0xc0] sm:$0xff]
        %v332 = vld [vmem:[%s240 + $0xc8] sm:$0xff]
        %v333 = vld [vmem:[%s240 + $0xd0] sm:$0xff]
        %v334 = vld [vmem:[%s240 + $0xd8] sm:$0xff]
        %v335 = vld [vmem:[%s240 + $0xe0] sm:$0xff]
        %v336 = vld [vmem:[%s240 + $0xe8] sm:$0xff]
        %v337 = vld [vmem:[%s240 + $0xf0] sm:$0xff]
        %v338 = vld [vmem:[%s240 + $0xf8] sm:$0xff]
        %339 = vmatpush.msra.mxu0 %v337
        %340 = vmatpush.msra.mxu0 %v335
        %341 = vmatpush.msra.mxu0 %v333
        %342 = vmatpush.msra.mxu0 %v331
        %343 = vmatpush.msra.mxu0 %v329
        %344 = vmatpush.msra.mxu0 %v327
        %345 = vmatpush.msra.mxu0 %v325
        %346 = vmatpush.msra.mxu0 %v323
        %347 = vmatpush.msra.mxu0 %v321
        %348 = vmatpush.msra.mxu0 %v319
        %349 = vmatpush.msra.mxu0 %v317
        %350 = vmatpush.msra.mxu0 %v315
        %351 = vmatpush.msra.mxu0 %v313
        %352 = vmatpush.msra.mxu0 %v311
        %353 = vmatpush.msra.mxu0 %v309
        %354 = vmatpush.msra.mxu0 %v307
        %355 = vmatmul.f32.gmra.mxu0 %v299
        %v356 = vpop.f32.mrf.mxu0
        %v357 = vadd.f32 0.0, %v356
        %358 = vmatmul.f32.gmra.mxu0 %v300
        %v359 = vpop.f32.mrf.mxu0
        %v360 = vadd.f32 0.0, %v359
        %361 = vmatmul.f32.gmra.mxu0 %v301
        %v362 = vpop.f32.mrf.mxu0
        %v363 = vadd.f32 0.0, %v362
        %364 = vmatmul.f32.gmra.mxu0 %v302
        %v365 = vpop.f32.mrf.mxu0
        %v366 = vadd.f32 0.0, %v365
        %367 = vmatmul.f32.gmra.mxu0 %v303
        %v368 = vpop.f32.mrf.mxu0
        %v369 = vadd.f32 0.0, %v368
        %370 = vmatmul.f32.gmra.mxu0 %v304
        %v371 = vpop.f32.mrf.mxu0
        %v372 = vadd.f32 0.0, %v371
        %373 = vmatmul.f32.gmra.mxu0 %v305
        %v374 = vpop.f32.mrf.mxu0
        %v375 = vadd.f32 0.0, %v374
        %376 = vmatmul.f32.gmra.mxu0 %v306
        %v377 = vpop.f32.mrf.mxu0
        %v378 = vadd.f32 0.0, %v377
        %379 = vdwg.mxu0
        %380 = vmatpush.msra.mxu0 %v338
        %381 = vmatpush.msra.mxu0 %v336
        %382 = vmatpush.msra.mxu0 %v334
        %383 = vmatpush.msra.mxu0 %v332
        %384 = vmatpush.msra.mxu0 %v330
        %385 = vmatpush.msra.mxu0 %v328
        %386 = vmatpush.msra.mxu0 %v326
        %387 = vmatpush.msra.mxu0 %v324
        %388 = vmatpush.msra.mxu0 %v322
        %389 = vmatpush.msra.mxu0 %v320
        %390 = vmatpush.msra.mxu0 %v318
        %391 = vmatpush.msra.mxu0 %v316
        %392 = vmatpush.msra.mxu0 %v314
        %393 = vmatpush.msra.mxu0 %v312
        %394 = vmatpush.msra.mxu0 %v310
        %395 = vmatpush.msra.mxu0 %v308
        %396 = vmatmul.f32.gmra.mxu0 %v299
        %v397 = vpop.f32.mrf.mxu0
        %v398 = vadd.f32 0.0, %v397
        %399 = vmatmul.f32.gmra.mxu0 %v300
        %v400 = vpop.f32.mrf.mxu0
        %v401 = vadd.f32 0.0, %v400
        %402 = vmatmul.f32.gmra.mxu0 %v301
        %v403 = vpop.f32.mrf.mxu0
        %v404 = vadd.f32 0.0, %v403
        %405 = vmatmul.f32.gmra.mxu0 %v302
        %v406 = vpop.f32.mrf.mxu0
        %v407 = vadd.f32 0.0, %v406
        %408 = vmatmul.f32.gmra.mxu0 %v303
        %v409 = vpop.f32.mrf.mxu0
        %v410 = vadd.f32 0.0, %v409
        %411 = vmatmul.f32.gmra.mxu0 %v304
        %v412 = vpop.f32.mrf.mxu0
        %v413 = vadd.f32 0.0, %v412
        %414 = vmatmul.f32.gmra.mxu0 %v305
        %v415 = vpop.f32.mrf.mxu0
        %v416 = vadd.f32 0.0, %v415
        %417 = vmatmul.f32.gmra.mxu0 %v306
        %v418 = vpop.f32.mrf.mxu0
        %v419 = vadd.f32 0.0, %v418
        %420 = vdwg.mxu0
        %v421 = vxor.u32 %v357, 2147483648
        %v422 = vxor.u32 %v360, 2147483648
        %v423 = vxor.u32 %v363, 2147483648
        %v424 = vxor.u32 %v366, 2147483648
        %v425 = vxor.u32 %v369, 2147483648
        %v426 = vxor.u32 %v372, 2147483648
        %v427 = vxor.u32 %v375, 2147483648
        %v428 = vxor.u32 %v378, 2147483648
        %v429 = vmul.f32 %v421, 1.442695
        %v430 = vpow.pop %v429
        %v431 = vmul.f32 %v422, 1.442695
        %v432 = vpow.pop %v431
        %v433 = vmul.f32 %v423, 1.442695
        %v434 = vpow.pop %v433
        %v435 = vmul.f32 %v424, 1.442695
        %v436 = vpow.pop %v435
        %v437 = vmul.f32 %v425, 1.442695
        %v438 = vpow.pop %v437
        %v439 = vmul.f32 %v426, 1.442695
        %v440 = vpow.pop %v439
        %v441 = vmul.f32 %v427, 1.442695
        %v442 = vpow.pop %v441
        %v443 = vmul.f32 %v428, 1.442695
        %v444 = vpow.pop %v443
        %v445 = vadd.f32 %v430, 1.0
        %v446 = vadd.f32 %v432, 1.0
        %v447 = vadd.f32 %v434, 1.0
        %v448 = vadd.f32 %v436, 1.0
        %v449 = vadd.f32 %v438, 1.0
        %v450 = vadd.f32 %v440, 1.0
        %v451 = vadd.f32 %v442, 1.0
        %v452 = vadd.f32 %v444, 1.0
        %v453 = vrcp.pop %v445
        %v454 = vmul.f32 %v445, %v453
        %v455 = vsub.f32 1.0, %v454
        %v456 = vmul.f32 %v453, %v455
        %v457 = vadd.f32 %v453, %v456
        %vm458 = vweird.f32 %v445
        %vm459 = vweird.f32 %v453
        %vm460 = vmor %vm458, %vm459
        %v461 = vsel %vm460, %v453, %v457
        %v462 = vand.u32 2147483647, %v445
        %vm463 = vcmp.eq.f32.partialorder %v462, 8.507059e+37
        %v464 = vand.u32 %v445, 2147483648
        %v465 = vor.u32 1.1754944e-38, %v464
        %v466 = vsel %vm463, %v465, %v461
        %v467 = vmul.f32 1.0, %v466
        %v468 = vrcp.pop %v446
        %v469 = vmul.f32 %v446, %v468
        %v470 = vsub.f32 1.0, %v469
        %v471 = vmul.f32 %v468, %v470
        %v472 = vadd.f32 %v468, %v471
        %vm473 = vweird.f32 %v446
        %vm474 = vweird.f32 %v468
        %vm475 = vmor %vm473, %vm474
        %v476 = vsel %vm475, %v468, %v472
        %v477 = vand.u32 2147483647, %v446
        %vm478 = vcmp.eq.f32.partialorder %v477, 8.507059e+37
        %v479 = vand.u32 %v446, 2147483648
        %v480 = vor.u32 1.1754944e-38, %v479
        %v481 = vsel %vm478, %v480, %v476
        %v482 = vmul.f32 1.0, %v481
        %v483 = vrcp.pop %v447
        %v484 = vmul.f32 %v447, %v483
        %v485 = vsub.f32 1.0, %v484
        %v486 = vmul.f32 %v483, %v485
        %v487 = vadd.f32 %v483, %v486
        %vm488 = vweird.f32 %v447
        %vm489 = vweird.f32 %v483
        %vm490 = vmor %vm488, %vm489
        %v491 = vsel %vm490, %v483, %v487
        %v492 = vand.u32 2147483647, %v447
        %vm493 = vcmp.eq.f32.partialorder %v492, 8.507059e+37
        %v494 = vand.u32 %v447, 2147483648
        %v495 = vor.u32 1.1754944e-38, %v494
        %v496 = vsel %vm493, %v495, %v491
        %v497 = vmul.f32 1.0, %v496
        %v498 = vrcp.pop %v448
        %v499 = vmul.f32 %v448, %v498
        %v500 = vsub.f32 1.0, %v499
        %v501 = vmul.f32 %v498, %v500
        %v502 = vadd.f32 %v498, %v501
        %vm503 = vweird.f32 %v448
        %vm504 = vweird.f32 %v498
        %vm505 = vmor %vm503, %vm504
        %v506 = vsel %vm505, %v498, %v502
        %v507 = vand.u32 2147483647, %v448
        %vm508 = vcmp.eq.f32.partialorder %v507, 8.507059e+37
        %v509 = vand.u32 %v448, 2147483648
        %v510 = vor.u32 1.1754944e-38, %v509
        %v511 = vsel %vm508, %v510, %v506
        %v512 = vmul.f32 1.0, %v511
        %v513 = vrcp.pop %v449
        %v514 = vmul.f32 %v449, %v513
        %v515 = vsub.f32 1.0, %v514
        %v516 = vmul.f32 %v513, %v515
        %v517 = vadd.f32 %v513, %v516
        %vm518 = vweird.f32 %v449
        %vm519 = vweird.f32 %v513
        %vm520 = vmor %vm518, %vm519
        %v521 = vsel %vm520, %v513, %v517
        %v522 = vand.u32 2147483647, %v449
        %vm523 = vcmp.eq.f32.partialorder %v522, 8.507059e+37
        %v524 = vand.u32 %v449, 2147483648
        %v525 = vor.u32 1.1754944e-38, %v524
        %v526 = vsel %vm523, %v525, %v521
        %v527 = vmul.f32 1.0, %v526
        %v528 = vrcp.pop %v450
        %v529 = vmul.f32 %v450, %v528
        %v530 = vsub.f32 1.0, %v529
        %v531 = vmul.f32 %v528, %v530
        %v532 = vadd.f32 %v528, %v531
        %vm533 = vweird.f32 %v450
        %vm534 = vweird.f32 %v528
        %vm535 = vmor %vm533, %vm534
        %v536 = vsel %vm535, %v528, %v532
        %v537 = vand.u32 2147483647, %v450
        %vm538 = vcmp.eq.f32.partialorder %v537, 8.507059e+37
        %v539 = vand.u32 %v450, 2147483648
        %v540 = vor.u32 1.1754944e-38, %v539
        %v541 = vsel %vm538, %v540, %v536
        %v542 = vmul.f32 1.0, %v541
        %v543 = vrcp.pop %v451
        %v544 = vmul.f32 %v451, %v543
        %v545 = vsub.f32 1.0, %v544
        %v546 = vmul.f32 %v543, %v545
        %v547 = vadd.f32 %v543, %v546
        %vm548 = vweird.f32 %v451
        %vm549 = vweird.f32 %v543
        %vm550 = vmor %vm548, %vm549
        %v551 = vsel %vm550, %v543, %v547
        %v552 = vand.u32 2147483647, %v451
        %vm553 = vcmp.eq.f32.partialorder %v552, 8.507059e+37
        %v554 = vand.u32 %v451, 2147483648
        %v555 = vor.u32 1.1754944e-38, %v554
        %v556 = vsel %vm553, %v555, %v551
        %v557 = vmul.f32 1.0, %v556
        %v558 = vrcp.pop %v452
        %v559 = vmul.f32 %v452, %v558
        %v560 = vsub.f32 1.0, %v559
        %v561 = vmul.f32 %v558, %v560
        %v562 = vadd.f32 %v558, %v561
        %vm563 = vweird.f32 %v452
        %vm564 = vweird.f32 %v558
        %vm565 = vmor %vm563, %vm564
        %v566 = vsel %vm565, %v558, %v562
        %v567 = vand.u32 2147483647, %v452
        %vm568 = vcmp.eq.f32.partialorder %v567, 8.507059e+37
        %v569 = vand.u32 %v452, 2147483648
        %v570 = vor.u32 1.1754944e-38, %v569
        %v571 = vsel %vm568, %v570, %v566
        %v572 = vmul.f32 1.0, %v571
        %v573 = vmul.f32 %v357, %v467
        %v574 = vmul.f32 %v360, %v482
        %v575 = vmul.f32 %v363, %v497
        %v576 = vmul.f32 %v366, %v512
        %v577 = vmul.f32 %v369, %v527
        %v578 = vmul.f32 %v372, %v542
        %v579 = vmul.f32 %v375, %v557
        %v580 = vmul.f32 %v378, %v572
        %v581 = vmul.f32 %v573, %v398
        %v582 = vmul.f32 %v574, %v401
        %v583 = vmul.f32 %v575, %v404
        %v584 = vmul.f32 %v576, %v407
        %v585 = vmul.f32 %v577, %v410
        %v586 = vmul.f32 %v578, %v413
        %v587 = vmul.f32 %v579, %v416
        %v588 = vmul.f32 %v580, %v419
        %v589 = vld [vmem:[#allocation2] sm:$0xff]
        %v590 = vld [vmem:[#allocation2 + $0x8] sm:$0xff]
        %v591 = vld [vmem:[#allocation2 + $0x10] sm:$0xff]
        %v592 = vld [vmem:[#allocation2 + $0x18] sm:$0xff]
        %v593 = vld [vmem:[#allocation2 + $0x20] sm:$0xff]
        %v594 = vld [vmem:[#allocation2 + $0x28] sm:$0xff]
        %v595 = vld [vmem:[#allocation2 + $0x30] sm:$0xff]
        %v596 = vld [vmem:[#allocation2 + $0x38] sm:$0xff]
        %v597 = vld [vmem:[%s250] sm:$0xff]
        %v598 = vld [vmem:[%s250 + $0x8] sm:$0xff]
        %v599 = vld [vmem:[%s250 + $0x10] sm:$0xff]
        %v600 = vld [vmem:[%s250 + $0x18] sm:$0xff]
        %v601 = vld [vmem:[%s250 + $0x20] sm:$0xff]
        %v602 = vld [vmem:[%s250 + $0x28] sm:$0xff]
        %v603 = vld [vmem:[%s250 + $0x30] sm:$0xff]
        %v604 = vld [vmem:[%s250 + $0x38] sm:$0xff]
        %v605 = vld [vmem:[%s250 + $0x40] sm:$0xff]
        %v606 = vld [vmem:[%s250 + $0x48] sm:$0xff]
        %v607 = vld [vmem:[%s250 + $0x50] sm:$0xff]
        %v608 = vld [vmem:[%s250 + $0x58] sm:$0xff]
        %v609 = vld [vmem:[%s250 + $0x60] sm:$0xff]
        %v610 = vld [vmem:[%s250 + $0x68] sm:$0xff]
        %v611 = vld [vmem:[%s250 + $0x70] sm:$0xff]
        %v612 = vld [vmem:[%s250 + $0x78] sm:$0xff]
        %613 = vmatpush.msra.mxu0 %v612
        %614 = vmatpush.msra.mxu0 %v611
        %615 = vmatpush.msra.mxu0 %v610
        %616 = vmatpush.msra.mxu0 %v609
        %617 = vmatpush.msra.mxu0 %v608
        %618 = vmatpush.msra.mxu0 %v607
        %619 = vmatpush.msra.mxu0 %v606
        %620 = vmatpush.msra.mxu0 %v605
        %621 = vmatpush.msra.mxu0 %v604
        %622 = vmatpush.msra.mxu0 %v603
        %623 = vmatpush.msra.mxu0 %v602
        %624 = vmatpush.msra.mxu0 %v601
        %625 = vmatpush.msra.mxu0 %v600
        %626 = vmatpush.msra.mxu0 %v599
        %627 = vmatpush.msra.mxu0 %v598
        %628 = vmatpush.msra.mxu0 %v597
        %629 = vmatmul.f32.gmra.mxu0 %v581
        %v630 = vpop.f32.mrf.mxu0
        %v631 = vadd.f32 0.0, %v630
        %632 = vmatmul.f32.gmra.mxu0 %v582
        %v633 = vpop.f32.mrf.mxu0
        %v634 = vadd.f32 0.0, %v633
        %635 = vmatmul.f32.gmra.mxu0 %v583
        %v636 = vpop.f32.mrf.mxu0
        %v637 = vadd.f32 0.0, %v636
        %638 = vmatmul.f32.gmra.mxu0 %v584
        %v639 = vpop.f32.mrf.mxu0
        %v640 = vadd.f32 0.0, %v639
        %641 = vmatmul.f32.gmra.mxu0 %v585
        %v642 = vpop.f32.mrf.mxu0
        %v643 = vadd.f32 0.0, %v642
        %644 = vmatmul.f32.gmra.mxu0 %v586
        %v645 = vpop.f32.mrf.mxu0
        %v646 = vadd.f32 0.0, %v645
        %647 = vmatmul.f32.gmra.mxu0 %v587
        %v648 = vpop.f32.mrf.mxu0
        %v649 = vadd.f32 0.0, %v648
        %650 = vmatmul.f32.gmra.mxu0 %v588
        %v651 = vpop.f32.mrf.mxu0
        %v652 = vadd.f32 0.0, %v651
        %653 = vdwg.mxu0
        %v654 = vadd.f32 %v589, %v631
        %v655 = vadd.f32 %v590, %v634
        %v656 = vadd.f32 %v591, %v637
        %v657 = vadd.f32 %v592, %v640
        %v658 = vadd.f32 %v593, %v643
        %v659 = vadd.f32 %v594, %v646
        %v660 = vadd.f32 %v595, %v649
        %v661 = vadd.f32 %v596, %v652
        %662 = vst [vmem:[#allocation2] sm:$0xff] %v654
        %663 = vst [vmem:[#allocation2 + $0x8] sm:$0xff] %v655
        %664 = vst [vmem:[#allocation2 + $0x10] sm:$0xff] %v656
        %665 = vst [vmem:[#allocation2 + $0x18] sm:$0xff] %v657
        %666 = vst [vmem:[#allocation2 + $0x20] sm:$0xff] %v658
        %667 = vst [vmem:[#allocation2 + $0x28] sm:$0xff] %v659
        %668 = vst [vmem:[#allocation2 + $0x30] sm:$0xff] %v660
        %669 = vst [vmem:[#allocation2 + $0x38] sm:$0xff] %v661
        %p670 = scmp.eq.s32.totalorder %s28, 2
        // Predicated region
        $region49: #{tpu_custom_call.1} parent=31 // pred_check
          %p671 = pneg %p670
        $region50: #{tpu_custom_call.1} parent=31 // pred_check_branch
          %673 = sbr.rel (%p671) target = $region52
        $region51: #{tpu_custom_call.1} parent=31 // pred_region
          %v674 = vld [vmem:[#allocation2] sm:$0xff]
          %v675 = vld [vmem:[#allocation2 + $0x8] sm:$0xff]
          %v676 = vld [vmem:[#allocation2 + $0x10] sm:$0xff]
          %v677 = vld [vmem:[#allocation2 + $0x18] sm:$0xff]
          %v678 = vld [vmem:[#allocation2 + $0x20] sm:$0xff]
          %v679 = vld [vmem:[#allocation2 + $0x28] sm:$0xff]
          %v680 = vld [vmem:[#allocation2 + $0x30] sm:$0xff]
          %v681 = vld [vmem:[#allocation2 + $0x38] sm:$0xff]
          %682 = vst [vmem:[%s283] sm:$0xff] %v674
          %683 = vst [vmem:[%s283 + $0x8] sm:$0xff] %v675
          %684 = vst [vmem:[%s283 + $0x10] sm:$0xff] %v676
          %685 = vst [vmem:[%s283 + $0x18] sm:$0xff] %v677
          %686 = vst [vmem:[%s283 + $0x20] sm:$0xff] %v678
          %687 = vst [vmem:[%s283 + $0x28] sm:$0xff] %v679
          %688 = vst [vmem:[%s283 + $0x30] sm:$0xff] %v680
          %689 = vst [vmem:[%s283 + $0x38] sm:$0xff] %v681
        $region52: #{tpu_custom_call.1} parent=31 // pred_fallthru
          _
        %s690 = sand.u32 %s121, 1
        %s691 = scalar_lea.sflag [#allocation5], %s690
        %s692 = sand.u32 %s121, 1
        %s693 = smul.addr %s692, 64
        %s694 = scalar_lea.vmem [#allocation9], %s693
        // Predicated region
        $region53: #{tpu_custom_call.1} parent=31 // pred_check
          %p695 = pneg %p131
        $region54: #{tpu_custom_call.1} parent=31 // pred_check_branch
          %697 = sbr.rel (%p695) target = $region56
        $region55: #{tpu_custom_call.1} parent=31 // pred_region
          %s698 = smul.u32 8, %s27
          %700 = vsyncadd %s691, 0
          %s701 = smul.addr %s698, 8
          %s702 = scalar_lea.hbm %s3, %s701
          %s703 = sshll.u32 %s694, 4
          %s704 = int_to_ptr.vmem [resolvable:$true] %s703
          %s705 = sshll.u32 %s702, 4
          %s706 = int_to_ptr.hbm [resolvable:$true] %s705
          %711 = dma.vmem_to_hbm [thread:$0]  %s704, 1024, %s706, %s691, 128, 128, 8
        $region56: #{tpu_custom_call.1} parent=31 // pred_fallthru
          _
      $region32: #{tpu_custom_call.1} parent=5 // pred_fallthru
        _
      %p712 = scmp.le.s32.totalorder 2, %s18
      // Predicated region
      $region57: #{tpu_custom_call.1} parent=5 // pred_check
        %p713 = pneg %p712
      $region58: #{tpu_custom_call.1} parent=5 // pred_check_branch
        %715 = sbr.rel (%p713) target = $region60
      $region59: #{tpu_custom_call.1} parent=5 // pred_region
        %s716 = ssub.s32 %s18, 2
        // Predicated region
        $region61: #{tpu_custom_call.1} parent=59 // pred_check
          %p717 = pneg %p137
        $region62: #{tpu_custom_call.1} parent=59 // pred_check_branch
          %719 = sbr.rel (%p717) target = $region64
        $region63: #{tpu_custom_call.1} parent=59 // pred_region
          %s720 = sand.u32 %s122, 1
          %s721 = scalar_lea.sflag [#allocation5], %s720
          %s722 = sand.u32 %s122, 1
          %s723 = smul.addr %s722, 64
          %s724 = scalar_lea.vmem [#allocation9], %s723
          %726 = dma.done %s721, 1024
        $region64: #{tpu_custom_call.1} parent=59 // pred_fallthru
          _
      $region60: #{tpu_custom_call.1} parent=5 // pred_fallthru
        _
    $region6: #{tpu_custom_call.1} parent=1 // loop_footer
      %s22 = sadd.s32 1, %s18
    $region7: #{tpu_custom_call.1} parent=1 // loop_footer_branch
      %17 = sbr.rel target = $region3
    $region8: #{tpu_custom_call.1} parent=1 // loop_exit
      _
    %727 = vsyncpa [#allocation4], 1
    %s728 = scalar_lea.sflag [#allocation4], 1
    %729 = vsyncpa %s728, 1
    %730 = vsyncpa [#allocation7], 1
    %s731 = scalar_lea.sflag [#allocation7], 1
    %732 = vsyncpa %s731, 1
    %733 = vsyncpa [#allocation5], 1
    %s734 = scalar_lea.sflag [#allocation5], 1
    %735 = vsyncpa %s734, 1

</llo_original>
